<compile_context>
chip_gen: v7x
topology: tpu7x:2x2x1
jax: 0.10.0
libtpu: 0.0.40
codegen_flags: <defaults>
</compile_context>

<pallas_src>
import jax
import jax.numpy as jnp
from jax.experimental import pallas as pl
from jax.experimental.pallas import tpu as pltpu

THRESH = 0.1            # proximity threshold from the PyTorch module
PENALTY = 50.0          # loss value when an obstacle is "hit"
N_OBST = 3              # the PyTorch forward loops over range(3) obstacles
LANE = 128
DEFAULT_MAX_TILE = 64 * 1024          # lanes / grid step; ~8 MiB double-buffered f32 input
VMEM_LIMIT_BYTES = 32 * 1024 * 1024   # explicit budget, safe on v5e/v6e/v7x


def _round_up(x, m):
    return ((x + m - 1) // m) * m


def _obstacle_kernel(stk_ref, out_ref, acc_lx, acc_ly, acc_r):
    # grid = (ncores, tiles_per_core): axis 0 "parallel" (v7x megacore split),
    # axis 1 "arbitrary" (reduction over this core's B*T lane tiles).
    j = pl.program_id(1)

    @pl.when(j == 0)
    def _init():
        acc_lx[...] = jnp.full_like(acc_lx, jnp.inf)
        acc_ly[...] = jnp.full_like(acc_ly, jnp.inf)
        acc_r[...] = jnp.full_like(acc_r, jnp.inf)

    # cast AFTER the DMA (inputs stream in their native dtype; compare in f32)
    s = stk_ref[...].astype(jnp.float32)        # (9, tile)
    lx = s[0:1, :]                              # left-hip x  (joint 21)
    ly = s[1:2, :]                              # left-hip y  (joint 22)
    rxy = s[2:3, :]                             # right-hip x AND y (joint 24: [24,24,26] gather)
    ox = s[3:6, :]                              # obstacle x, rows = obstacle 0..2
    oy = s[6:9, :]                              # obstacle y, rows = obstacle 0..2
    oxy = s[3:9, :]                             # [ox ; oy]  (contiguous in the slab)

    # 12 predicate rows packed into three VPU chains (~6 VALU ops / 128-lane chunk,
    # down from four sublane-sparse compare+cast+RMW chains).
    d_lx = jnp.abs(ox - lx)                     # (3, tile)  |left-hip-x  - obst-x_i|
    d_ly = jnp.abs(oy - ly)                     # (3, tile)  |left-hip-y  - obst-y_i|
    d_r = jnp.abs(oxy - rxy)                    # (6, tile)  |right-hip   - obst-x_i / y_i|

    # per-tile cross-lane min (XLU) min-accumulated into tiny resident scratch;
    # any(|d| < thr) over all B*T  <=>  min(|d|) < thr, so no mask buffers needed.
    acc_lx[...] = jnp.minimum(acc_lx[...], jnp.min(d_lx, axis=1, keepdims=True))
    acc_ly[...] = jnp.minimum(acc_ly[...], jnp.min(d_ly, axis=1, keepdims=True))
    acc_r[...] = jnp.minimum(acc_r[...], jnp.min(d_r, axis=1, keepdims=True))

    @pl.when(j == pl.num_programs(1) - 1)
    def _finalize():
        thr = jnp.float32(THRESH)
        hx_l = (acc_lx[...] < thr).astype(jnp.float32)   # (3,1) any(|lx-ox_i|<t)
        hy_l = (acc_ly[...] < thr).astype(jnp.float32)   # (3,1) any(|ly-oy_i|<t)
        r = acc_r[...]                                   # (6,1)
        hx_r = (r[0:3, :] < thr).astype(jnp.float32)     # any(|rxy-ox_i|<t)
        hy_r = (r[3:6, :] < thr).astype(jnp.float32)     # any(|rxy-oy_i|<t)
        # PyTorch semantics: (any-x AND any-y) independently per side, OR over obstacles
        left_hit = jnp.minimum(hx_l, hy_l)
        right_hit = jnp.minimum(hx_r, hy_r)
        hit = jnp.max(jnp.maximum(left_hit, right_hit))
        flag = jnp.where(hit > 0.0, jnp.float32(1.0), jnp.float32(0.0))
        out_ref[...] = jnp.broadcast_to(flag, out_ref.shape)


def obstacle_loss(xyz_estim, obstacles_, wo=1.0, max_tile=DEFAULT_MAX_TILE):
    """Pallas TPU implementation of L_obstacles.forward.

    Returns a float32 scalar (0.0 or wo * 50.0); wo is applied at trace time.
    """
    B, T, D = xyz_estim.shape
    assert D >= 27, "needs joint-coordinate index 26 (as in the original module)"
    assert obstacles_.shape[0] == B and obstacles_.shape[1] == T
    assert obstacles_.shape[2] >= 2 and obstacles_.shape[3] >= N_OBST

    bt = B * T
    dt = xyz_estim.dtype

    # --- wrapper-side gather: only 3 hip series + 6 obstacle series, lane-dense
    #     over B*T, kept in the input's native dtype (upcast happens in-kernel). ---
    hips = jnp.stack([xyz_estim[:, :, 21].reshape(bt),
                      xyz_estim[:, :, 22].reshape(bt),
                      xyz_estim[:, :, 24].reshape(bt)], axis=0)                 # (3, BT)
    obs_xy = jnp.transpose(obstacles_[:, :, 0:2, :N_OBST].astype(dt),
                           (2, 3, 0, 1)).reshape(2 * N_OBST, bt)                # (6, BT)

    # --- tile sizing + optional 2-way TensorCore split (v7x megacore) ---
    max_tile = max(LANE, _round_up(int(max_tile), LANE))
    tile = min(max_tile, _round_up(bt, LANE))
    total_tiles = -(-bt // tile)
    ncores = 2 if total_tiles >= 2 else 1        # skip split when launch cost dominates
    tiles_per_core = -(-total_tiles // ncores)
    bt_pad = ncores * tiles_per_core * tile
    pad = bt_pad - bt

    if pad:
        # padded hip lanes = dtype's max FINITE value, obstacles = 0, so padded
        # lanes can never come within THRESH of an obstacle (no inf/NaN games).
        far = float(jnp.finfo(dt).max) if jnp.issubdtype(dt, jnp.floating) else 1e9
        hips = jnp.pad(hips, ((0, 0), (0, pad)), constant_values=far)
        obs_xy = jnp.pad(obs_xy, ((0, 0), (0, pad)))
    stacked = jnp.concatenate([hips, obs_xy], axis=0)                           # (9, BT_pad)

    flags = pl.pallas_call(
        _obstacle_kernel,
        out_shape=jax.ShapeDtypeStruct((8 * ncores, LANE), jnp.float32),
        grid_spec=pltpu.PrefetchScalarGridSpec(
            num_scalar_prefetch=0,
            grid=(ncores, tiles_per_core),
            in_specs=[pl.BlockSpec((3 * N_OBST, tile),
                                   lambda c, j: (0, c * tiles_per_core + j))],
            out_specs=pl.BlockSpec((8, LANE), lambda c, j: (c, 0)),
            # TODO(synk): on v5e, spend the freed VMEM on deeper input buffering
            # (pipeline_mode=pl.Buffered(3)) to better hide HBM jitter.
            scratch_shapes=[pltpu.VMEM((N_OBST, 1), jnp.float32),
                            pltpu.VMEM((N_OBST, 1), jnp.float32),
                            pltpu.VMEM((2 * N_OBST, 1), jnp.float32)],
        ),
        compiler_params=pltpu.CompilerParams(
            dimension_semantics=("parallel", "arbitrary"),
            vmem_limit_bytes=VMEM_LIMIT_BYTES),
    )(stacked)

    any_hit = jnp.max(flags)        # OR across the per-core 0/1 flag blocks
    return jnp.where(any_hit > 0.0,
                     jnp.float32(float(wo) * PENALTY), jnp.float32(0.0))


def _reference_loss(xyz, obs, wo=1.0):
    # pure-JAX/Python mirror of the PyTorch forward (data-dependent ifs)
    loss = 0.0
    for i in range(3):
        left = xyz[:, :, jnp.array([21, 22, 23])] - obs[:, :, :, i]
        right = xyz[:, :, jnp.array([24, 24, 26])] - obs[:, :, :, i]
        if bool(jnp.any(jnp.abs(left[:, :, 0]) < THRESH)):
            if bool(jnp.any(jnp.abs(left[:, :, 1]) < THRESH)):
                loss = PENALTY
        if bool(jnp.any(jnp.abs(right[:, :, 0]) < THRESH)):
            if bool(jnp.any(jnp.abs(right[:, :, 1]) < THRESH)):
                loss = PENALTY
    return wo * loss


if __name__ == "__main__":
    key = jax.random.PRNGKey(0)
    k1, k2, k3, k4 = jax.random.split(key, 4)

    # small shapes consistent with the module: batch=2, seq=8, 32 flattened joint coords
    B, T, D = 2, 8, 32
    xyz = jax.random.uniform(k1, (B, T, D), jnp.float32, -1.0, 1.0)
    obs = jax.random.uniform(k2, (B, T, 3, N_OBST), jnp.float32, -1.0, 1.0)

    got = jax.block_until_ready(obstacle_loss(xyz, obs))
    want = _reference_loss(xyz, obs)
    assert float(got) == float(want), (float(got), float(want))

    # forced hit: left hip lands exactly on obstacle 1 at one timestep
    xyz_hit = xyz.at[0, 3, 21].set(obs[0, 3, 0, 1]).at[0, 3, 22].set(obs[0, 3, 1, 1])
    got_hit = jax.block_until_ready(obstacle_loss(xyz_hit, obs))
    want_hit = _reference_loss(xyz_hit, obs)
    assert float(got_hit) == float(want_hit) == PENALTY, (float(got_hit), float(want_hit))

    # forced miss: everything far away from every obstacle
    got_miss = jax.block_until_ready(obstacle_loss(xyz + 100.0, obs))
    assert float(got_miss) == 0.0, float(got_miss)

    # multi-tile + 2-way core-split grid path, padding, extra obstacle columns (N > 3)
    B2, T2 = 2, 300
    xyz2 = jax.random.uniform(k3, (B2, T2, D), jnp.float32, -1.0, 1.0)
    obs2 = jax.random.uniform(k4, (B2, T2, 3, 5), jnp.float32, -1.0, 1.0)
    got2 = jax.block_until_ready(obstacle_loss(xyz2, obs2, max_tile=256))
    want2 = _reference_loss(xyz2, obs2)
    assert float(got2) == float(want2), (float(got2), float(want2))

    print("KERNEL_OK")
</pallas_src>

<mosaic_0001>
module attributes {stable_mosaic.version = 11 : i64} {
  func.func @_obstacle_kernel(%arg0: i32, %arg1: i32, %arg2: memref<9x128xf32, #tpu.memory_space<vmem>>, %arg3: memref<8x128xf32, #tpu.memory_space<vmem>>, %arg4: memref<3x1xf32, #tpu.memory_space<vmem>>, %arg5: memref<3x1xf32, #tpu.memory_space<vmem>>, %arg6: memref<6x1xf32, #tpu.memory_space<vmem>>) attributes {dimension_semantics = [#tpu.dimension_semantics<parallel>, #tpu.dimension_semantics<arbitrary>], iteration_bounds = array<i64: 1, 1>, scalar_prefetch = 0 : i64, scratch_operands = 3 : i64, tpu.core_type = #tpu.core_type<tc>, window_params = [{transform_indices = @transform_0, window_bounds = array<i64: 9, 128>}, {transform_indices = @transform_1, window_bounds = array<i64: 8, 128>}]} {
    %c0_i32 = arith.constant 0 : i32
    %0 = arith.cmpi eq, %arg1, %c0_i32 : i32
    %1 = arith.extui %0 : i1 to i32
    %c0_i32_0 = arith.constant 0 : i32
    %2 = arith.cmpi ne, %1, %c0_i32_0 : i32
    scf.if %2 {
      %cst_18 = arith.constant 0x7F800000 : f32
      %37 = vector.broadcast %cst_18 : f32 to vector<3x1xf32>
      %c0_19 = arith.constant 0 : index
      %c0_20 = arith.constant 0 : index
      %38 = vector.load %arg4[%c0_19, %c0_20] : memref<3x1xf32, #tpu.memory_space<vmem>>, vector<3x1xf32>
      tpu.vector_store %arg4[%c0_19, %c0_20], %37 {strides = array<i32>} : memref<3x1xf32, #tpu.memory_space<vmem>>, vector<3x1xf32>,
      %cst_21 = arith.constant 0x7F800000 : f32
      %39 = vector.broadcast %cst_21 : f32 to vector<3x1xf32>
      %c0_22 = arith.constant 0 : index
      %c0_23 = arith.constant 0 : index
      %40 = vector.load %arg5[%c0_22, %c0_23] : memref<3x1xf32, #tpu.memory_space<vmem>>, vector<3x1xf32>
      tpu.vector_store %arg5[%c0_22, %c0_23], %39 {strides = array<i32>} : memref<3x1xf32, #tpu.memory_space<vmem>>, vector<3x1xf32>,
      %cst_24 = arith.constant 0x7F800000 : f32
      %41 = vector.broadcast %cst_24 : f32 to vector<6x1xf32>
      %c0_25 = arith.constant 0 : index
      %c0_26 = arith.constant 0 : index
      %42 = vector.load %arg6[%c0_25, %c0_26] : memref<6x1xf32, #tpu.memory_space<vmem>>, vector<6x1xf32>
      tpu.vector_store %arg6[%c0_25, %c0_26], %41 {strides = array<i32>} : memref<6x1xf32, #tpu.memory_space<vmem>>, vector<6x1xf32>,
    } else {
    }
    %c0 = arith.constant 0 : index
    %c0_1 = arith.constant 0 : index
    %3 = vector.load %arg2[%c0, %c0_1] : memref<9x128xf32, #tpu.memory_space<vmem>>, vector<9x128xf32>
    %4 = vector.extract_strided_slice %3 {offsets = [0, 0], sizes = [1, 128], strides = [1, 1]} : vector<9x128xf32> to vector<1x128xf32>
    %5 = vector.extract_strided_slice %3 {offsets = [1, 0], sizes = [1, 128], strides = [1, 1]} : vector<9x128xf32> to vector<1x128xf32>
    %6 = vector.extract_strided_slice %3 {offsets = [2, 0], sizes = [1, 128], strides = [1, 1]} : vector<9x128xf32> to vector<1x128xf32>
    %7 = vector.extract_strided_slice %3 {offsets = [3, 0], sizes = [3, 128], strides = [1, 1]} : vector<9x128xf32> to vector<3x128xf32>
    %8 = vector.extract_strided_slice %3 {offsets = [6, 0], sizes = [3, 128], strides = [1, 1]} : vector<9x128xf32> to vector<3x128xf32>
    %9 = vector.extract_strided_slice %3 {offsets = [3, 0], sizes = [6, 128], strides = [1, 1]} : vector<9x128xf32> to vector<6x128xf32>
    %10 = vector.broadcast %4 : vector<1x128xf32> to vector<3x128xf32>
    %11 = arith.subf %7, %10 : vector<3x128xf32>
    %12 = math.absf %11 : vector<3x128xf32>
    %13 = vector.broadcast %5 : vector<1x128xf32> to vector<3x128xf32>
    %14 = arith.subf %8, %13 : vector<3x128xf32>
    %15 = math.absf %14 : vector<3x128xf32>
    %16 = vector.broadcast %6 : vector<1x128xf32> to vector<6x128xf32>
    %17 = arith.subf %9, %16 : vector<6x128xf32>
    %18 = math.absf %17 : vector<6x128xf32>
    %c0_2 = arith.constant 0 : index
    %c0_3 = arith.constant 0 : index
    %19 = vector.load %arg4[%c0_2, %c0_3] : memref<3x1xf32, #tpu.memory_space<vmem>>, vector<3x1xf32>
    %cst = arith.constant dense<0x7F800000> : vector<3xf32>
    %20 = vector.multi_reduction <minimumf>, %12, %cst [1] : vector<3x128xf32> to vector<3xf32>
    %21 = vector.shape_cast %20 : vector<3xf32> to vector<3x1xf32>
    %22 = arith.minimumf %19, %21 : vector<3x1xf32>
    %c0_4 = arith.constant 0 : index
    %c0_5 = arith.constant 0 : index
    %23 = vector.load %arg4[%c0_4, %c0_5] : memref<3x1xf32, #tpu.memory_space<vmem>>, vector<3x1xf32>
    tpu.vector_store %arg4[%c0_4, %c0_5], %22 {strides = array<i32>} : memref<3x1xf32, #tpu.memory_space<vmem>>, vector<3x1xf32>,
    %c0_6 = arith.constant 0 : index
    %c0_7 = arith.constant 0 : index
    %24 = vector.load %arg5[%c0_6, %c0_7] : memref<3x1xf32, #tpu.memory_space<vmem>>, vector<3x1xf32>
    %cst_8 = arith.constant dense<0x7F800000> : vector<3xf32>
    %25 = vector.multi_reduction <minimumf>, %15, %cst_8 [1] : vector<3x128xf32> to vector<3xf32>
    %26 = vector.shape_cast %25 : vector<3xf32> to vector<3x1xf32>
    %27 = arith.minimumf %24, %26 : vector<3x1xf32>
    %c0_9 = arith.constant 0 : index
    %c0_10 = arith.constant 0 : index
    %28 = vector.load %arg5[%c0_9, %c0_10] : memref<3x1xf32, #tpu.memory_space<vmem>>, vector<3x1xf32>
    tpu.vector_store %arg5[%c0_9, %c0_10], %27 {strides = array<i32>} : memref<3x1xf32, #tpu.memory_space<vmem>>, vector<3x1xf32>,
    %c0_11 = arith.constant 0 : index
    %c0_12 = arith.constant 0 : index
    %29 = vector.load %arg6[%c0_11, %c0_12] : memref<6x1xf32, #tpu.memory_space<vmem>>, vector<6x1xf32>
    %cst_13 = arith.constant dense<0x7F800000> : vector<6xf32>
    %30 = vector.multi_reduction <minimumf>, %18, %cst_13 [1] : vector<6x128xf32> to vector<6xf32>
    %31 = vector.shape_cast %30 : vector<6xf32> to vector<6x1xf32>
    %32 = arith.minimumf %29, %31 : vector<6x1xf32>
    %c0_14 = arith.constant 0 : index
    %c0_15 = arith.constant 0 : index
    %33 = vector.load %arg6[%c0_14, %c0_15] : memref<6x1xf32, #tpu.memory_space<vmem>>, vector<6x1xf32>
    tpu.vector_store %arg6[%c0_14, %c0_15], %32 {strides = array<i32>} : memref<6x1xf32, #tpu.memory_space<vmem>>, vector<6x1xf32>,
    %c0_i32_16 = arith.constant 0 : i32
    %34 = arith.cmpi eq, %arg1, %c0_i32_16 : i32
    %35 = arith.extui %34 : i1 to i32
    %c0_i32_17 = arith.constant 0 : i32
    %36 = arith.cmpi ne, %35, %c0_i32_17 : i32
    scf.if %36 {
      %c0_18 = arith.constant 0 : index
      %c0_19 = arith.constant 0 : index
      %37 = vector.load %arg4[%c0_18, %c0_19] : memref<3x1xf32, #tpu.memory_space<vmem>>, vector<3x1xf32>
      %cst_20 = arith.constant 1.000000e-01 : f32
      %38 = vector.broadcast %cst_20 : f32 to vector<3x1xf32>
      %39 = arith.cmpf olt, %37, %38 : vector<3x1xf32>
      %40 = arith.extui %39 : vector<3x1xi1> to vector<3x1xi32>
      %41 = arith.sitofp %40 : vector<3x1xi32> to vector<3x1xf32>
      %c0_21 = arith.constant 0 : index
      %c0_22 = arith.constant 0 : index
      %42 = vector.load %arg5[%c0_21, %c0_22] : memref<3x1xf32, #tpu.memory_space<vmem>>, vector<3x1xf32>
      %cst_23 = arith.constant 1.000000e-01 : f32
      %43 = vector.broadcast %cst_23 : f32 to vector<3x1xf32>
      %44 = arith.cmpf olt, %42, %43 : vector<3x1xf32>
      %45 = arith.extui %44 : vector<3x1xi1> to vector<3x1xi32>
      %46 = arith.sitofp %45 : vector<3x1xi32> to vector<3x1xf32>
      %c0_24 = arith.constant 0 : index
      %c0_25 = arith.constant 0 : index
      %47 = vector.load %arg6[%c0_24, %c0_25] : memref<6x1xf32, #tpu.memory_space<vmem>>, vector<6x1xf32>
      %48 = vector.extract_strided_slice %47 {offsets = [0, 0], sizes = [3, 1], strides = [1, 1]} : vector<6x1xf32> to vector<3x1xf32>
      %cst_26 = arith.constant 1.000000e-01 : f32
      %49 = vector.broadcast %cst_26 : f32 to vector<3x1xf32>
      %50 = arith.cmpf olt, %48, %49 : vector<3x1xf32>
      %51 = arith.extui %50 : vector<3x1xi1> to vector<3x1xi32>
      %52 = arith.sitofp %51 : vector<3x1xi32> to vector<3x1xf32>
      %53 = vector.extract_strided_slice %47 {offsets = [3, 0], sizes = [3, 1], strides = [1, 1]} : vector<6x1xf32> to vector<3x1xf32>
      %cst_27 = arith.constant 1.000000e-01 : f32
      %54 = vector.broadcast %cst_27 : f32 to vector<3x1xf32>
      %55 = arith.cmpf olt, %53, %54 : vector<3x1xf32>
      %56 = arith.extui %55 : vector<3x1xi1> to vector<3x1xi32>
      %57 = arith.sitofp %56 : vector<3x1xi32> to vector<3x1xf32>
      %58 = arith.minimumf %41, %46 : vector<3x1xf32>
      %59 = arith.minimumf %52, %57 : vector<3x1xf32>
      %60 = arith.maximumf %58, %59 : vector<3x1xf32>
      %61 = vector.shape_cast %60 : vector<3x1xf32> to vector<1x3x1xf32>
      %cst_28 = arith.constant dense<0xFF800000> : vector<1xf32>
      %62 = vector.multi_reduction <maximumf>, %61, %cst_28 [1, 2] : vector<1x3x1xf32> to vector<1xf32>
      %63 = vector.shape_cast %62 : vector<1xf32> to vector<1x1x1xf32>
      %64 = vector.extract %63[0, 0, 0] : f32 from vector<1x1x1xf32>
      %cst_29 = arith.constant 0.000000e+00 : f32
      %65 = arith.cmpf ogt, %64, %cst_29 : f32
      %cst_30 = arith.constant 1.000000e+00 : f32
      %cst_31 = arith.constant 0.000000e+00 : f32
      %66 = arith.select %65, %cst_30, %cst_31 : f32
      %67 = vector.broadcast %66 : f32 to vector<8x128xf32>
      %c0_32 = arith.constant 0 : index
      %c0_33 = arith.constant 0 : index
      %68 = vector.load %arg3[%c0_32, %c0_33] : memref<8x128xf32, #tpu.memory_space<vmem>>, vector<8x128xf32>
      tpu.vector_store %arg3[%c0_32, %c0_33], %67 {strides = array<i32>} : memref<8x128xf32, #tpu.memory_space<vmem>>, vector<8x128xf32>,
    } else {
    }
    return
  }
  func.func @transform_0(%arg0: i32, %arg1: i32) -> (i32, i32) {
    %c1_i32 = arith.constant 1 : i32
    %0 = arith.muli %arg0, %c1_i32 : i32
    %1 = arith.addi %0, %arg1 : i32
    %c0_i32 = arith.constant 0 : i32
    %c0_i32_0 = arith.constant 0 : i32
    return %c0_i32, %1 : i32, i32
  }
  func.func @transform_1(%arg0: i32, %arg1: i32) -> (i32, i32) {
    %c0_i32 = arith.constant 0 : i32
    %c0_i32_0 = arith.constant 0 : i32
    return %arg0, %c0_i32 : i32, i32
  }
}

</mosaic_0001>

<llo_original>
// kernel: tpu_custom_call.1
$region0: #{tpu_custom_call.1}
  #allocation0 [shape = 'u32[]', space=smem, size = 0x4, offset = 0x4, fixed_abs, tag = 'smem constant byte address 0x4 - core index']
  #allocation1 [shape = 'u32[144,128]{1,0:T(1,128)}', space=vmem, size = 0x12000, scoped, tag = 'internal scratch']
  #allocation2 [shape = 'f32[3,1]{1,0:T(4,128)}', space=vmem, size = 0x800, scoped, tag = 'scratch operand']
  #allocation3 [shape = 'f32[3,1]{1,0:T(4,128)}', space=vmem, size = 0x800, scoped, tag = 'scratch operand']
  #allocation4 [shape = 'f32[6,1]{1,0:T(8,128)}', space=vmem, size = 0x1000, scoped, tag = 'scratch operand']
  %s0 = inlined_call_operand.hbm [shape: f32[9,128], index: 0, kind: input, shape index: {}]
  %s1 = inlined_call_operand.hbm [shape: f32[8,128], index: 1, kind: output, shape index: {}]
  %s2 = sld [smem:[#allocation0]]
  $region26: #{tpu_custom_call.1} parent=0
    _
  %s4 = ssub.s32 1, %s2
  %s5 = scalar_select 0, %s4, %s2
  $region1: #{tpu_custom_call.1} parent=0
    #allocation5 [shape = 'u8[8192]{0}', space=vmem, size = 0x2000, scoped, tag = 'input window, operand 0, single buffered']
    #allocation6 [shape = 's32[1]{0}', space=sflag, size = 0x4, scoped, tag = 'scoped memory for tpu_custom_call.1']
    #allocation7 [shape = 's32[1]{0}', space=sflag, size = 0x4, scoped, tag = 'scoped memory for tpu_custom_call.1']
    #allocation8 [shape = 'u8[4096]{0}', space=vmem, size = 0x1000, scoped, tag = 'output window, operand 0, single buffered']
    %6 = vsyncpa [#allocation6], 0
    %7 = vsyncpa [#allocation7], 0
    // Predicated region
    $region2: #{tpu_custom_call.1} parent=1 // pred_check
      _
    $region3: #{tpu_custom_call.1} parent=1 // pred_check_branch
      %9 = sbr.rel (0) target = $region5
    $region4: #{tpu_custom_call.1} parent=1 // pred_region
      %s10 = sadd.s32 0, 0
      %s12 = ssub.s32 256, 256
      %13 = vsyncadd [#allocation6], %s12
      %s14 = smul.addr %s10, 128
      %s15 = scalar_lea.hbm %s0, %s14
      %s16 = sshll.u32 [#allocation5], 4
      %s17 = int_to_ptr.vmem [resolvable:$true] %s16
      %22 = dma.hbm_to_vmem [thread:$0]  %s15, 256, %s17, [#allocation6], 128, 128, 8
    $region5: #{tpu_custom_call.1} parent=1 // pred_fallthru
      _
    // Predicated region
    $region6: #{tpu_custom_call.1} parent=1 // pred_check
      _
    $region7: #{tpu_custom_call.1} parent=1 // pred_check_branch
      %24 = sbr.rel (0) target = $region9
    $region8: #{tpu_custom_call.1} parent=1 // pred_region
      %25 = dma.done [#allocation6], 256
    $region9: #{tpu_custom_call.1} parent=1 // pred_fallthru
      _
    %s26 = sadd.s32 0, 0
    %p27 = scmp.eq.s32.totalorder 0, 0
    // Predicated region
    $region10: #{tpu_custom_call.1} parent=1 // pred_check
      %p28 = pneg %p27
    $region11: #{tpu_custom_call.1} parent=1 // pred_check_branch
      %30 = sbr.rel (%p28) target = $region13
    $region12: #{tpu_custom_call.1} parent=1 // pred_region
      %vm31 = vcmask 2048
      %32 = vst.msk [vmem:[#allocation2] sm:$0x7] %vm31, inf
      %33 = vst.msk [vmem:[#allocation3] sm:$0x7] %vm31, inf
      %vm34 = vcmask 5120
      %35 = vst.msk [vmem:[#allocation4] sm:$0x3f] %vm34, inf
    $region13: #{tpu_custom_call.1} parent=1 // pred_fallthru
      _
    %v36 = vld [vmem:[#allocation5] sm:$0xff]
    %v37 = vld [vmem:[#allocation5 + $0x8] sm:$0x1]
    %v38 = vlaneseq
    %v39 = vshrl.u32 %v38, 7
    %v40 = vsub.s32 0, %v39
    %v41 = vrot.slane %v36, %v40
    %v42 = vsub.f32 %v36, %v41
    %v43 = vand.u32 2147483647, %v42
    %v44 = vlaneseq
    %v45 = vshrl.u32 %v44, 7
    %v46 = vsub.s32 1, %v45
    %v47 = vrot.slane %v36, %v46
    %v48 = vsub.f32 %v36, %v47
    %v49 = vsub.f32 %v37, %v47
    %v50 = vand.u32 2147483647, %v48
    %v51 = vand.u32 2147483647, %v49
    %v52 = vlaneseq
    %v53 = vshrl.u32 %v52, 7
    %v54 = vsub.s32 2, %v53
    %v55 = vrot.slane %v36, %v54
    %v56 = vsub.f32 %v36, %v55
    %v57 = vsub.f32 %v37, %v55
    %v58 = vand.u32 2147483647, %v56
    %v59 = vand.u32 2147483647, %v57
    %v60 = vld [vmem:[#allocation2] sm:$0x7]
    %vm61 = vcmask 1045507
    %v62 = vsel %vm61, %v43, inf
    %63 = vmin.xlane.f32.xlu0 %v62
    %v64 = vpop.xlane.xlu0 %63
    %v66 = vrot.slane %v64, 3
    %v68 = vmin.f32 %v60, %v66
    %vm69 = vcmask 2048
    %70 = vst.msk [vmem:[#allocation2] sm:$0x7] %vm69, %v68
    %v71 = vld [vmem:[#allocation3] sm:$0x7]
    %vm72 = vcmask 1047558
    %v73 = vsel %vm72, %v50, inf
    %74 = vmin.xlane.f32.xlu0 %v73
    %v75 = vpop.xlane.xlu0 %74
    %vm76 = vcmask 1040384
    %v77 = vsel %vm76, %v51, inf
    %78 = vmin.xlane.f32.xlu0 %v77
    %v79 = vpop.xlane.xlu0 %78
    %vm82 = vcmask 1041408
    %v83 = vrot.slane %v75, 6
    %v84 = vrot.slane %v79, 6
    %v85 = vsel %vm82, %v83, %v84
    %v87 = vmin.f32 %v71, %v85
    %88 = vst.msk [vmem:[#allocation3] sm:$0x7] %vm69, %v87
    %v89 = vld [vmem:[#allocation4] sm:$0x3f]
    %vm90 = vcmask 1047555
    %v91 = vsel %vm90, %v58, inf
    %92 = vmin.xlane.f32.xlu0 %v91
    %v93 = vpop.xlane.xlu0 %92
    %v94 = vsel %vm76, %v59, inf
    %95 = vmin.xlane.f32.xlu0 %v94
    %v96 = vpop.xlane.xlu0 %95
    %vm99 = vcmask 1044480
    %v100 = vrot.slane %v93, 3
    %v101 = vrot.slane %v96, 3
    %v102 = vsel %vm99, %v100, %v101
    %v104 = vmin.f32 %v89, %v102
    %vm105 = vcmask 5120
    %106 = vst.msk [vmem:[#allocation4] sm:$0x3f] %vm105, %v104
    // Predicated region
    $region14: #{tpu_custom_call.1} parent=1 // pred_check
      %p107 = pneg %p27
    $region15: #{tpu_custom_call.1} parent=1 // pred_check_branch
      %109 = sbr.rel (%p107) target = $region17
    $region16: #{tpu_custom_call.1} parent=1 // pred_region
      %v110 = vld [vmem:[#allocation2] sm:$0x7]
      %vm111 = vcmp.lt.f32.partialorder %v110, 0.1
      %v112 = vsel %vm111, 1, 0
      %v113 = vcvt.s32.f32 %v112
      %v114 = vld [vmem:[#allocation3] sm:$0x7]
      %vm115 = vcmp.lt.f32.partialorder %v114, 0.1
      %v116 = vsel %vm115, 1, 0
      %v117 = vcvt.s32.f32 %v116
      %v118 = vld [vmem:[#allocation4] sm:$0x3f]
      %vm119 = vcmp.lt.f32.partialorder %v118, 0.1
      %v120 = vsel %vm119, 1, 0
      %v121 = vcvt.s32.f32 %v120
      %v122 = vmin.f32 %v113, %v117
      %v124 = vrot.slane %v121, 3
      %v126 = vmin.f32 %v121, %v124
      %v127 = vmax.f32 %v122, %v126
      %v128 = vsel %vm69, %v127, -inf
      %129 = vmax.xlane.f32.xlu0 %v128
      %v130 = vpop.xlane.xlu0 %129
      %v131 = vrot.slane %v130, 4
      %v132 = vmax.f32 %v130, %v131
      %v133 = vrot.slane %v132, 2
      %v134 = vmax.f32 %v132, %v133
      %v135 = vrot.slane %v134, 1
      %v136 = vmax.f32 %v134, %v135
      %s137 = vtos %v136
      %p138 = scmp.gt.f32.partialorder %s137, 0.0
      %s139 = scalar_select %p138, 1.0, 0.0
      %v140 = vstv %s139
      %141 = vst [vmem:[#allocation8] sm:$0xff] %v140
    $region17: #{tpu_custom_call.1} parent=1 // pred_fallthru
      _
    // Predicated region
    $region18: #{tpu_custom_call.1} parent=1 // pred_check
      _
    $region19: #{tpu_custom_call.1} parent=1 // pred_check_branch
      %143 = sbr.rel (0) target = $region21
    $region20: #{tpu_custom_call.1} parent=1 // pred_region
      %s145 = ssub.s32 128, 128
      %146 = vsyncadd [#allocation7], %s145
      %s148 = sshll.u32 [#allocation8], 4
      %s149 = int_to_ptr.vmem [resolvable:$true] %s148
      %151 = dma.vmem_to_hbm [thread:$0]  %s149, 128, %s1, [#allocation7]
    $region21: #{tpu_custom_call.1} parent=1 // pred_fallthru
      _
    // Predicated region
    $region22: #{tpu_custom_call.1} parent=1 // pred_check
      _
    $region23: #{tpu_custom_call.1} parent=1 // pred_check_branch
      %153 = sbr.rel (0) target = $region25
    $region24: #{tpu_custom_call.1} parent=1 // pred_region
      %154 = dma.done [#allocation7], 128
    $region25: #{tpu_custom_call.1} parent=1 // pred_fallthru
      _
    %155 = vsyncpa [#allocation6], 1
    %156 = vsyncpa [#allocation7], 1

</llo_original>
